<compile_context>
chip_gen: v6e
topology: v6e:2x2x1
jax: 0.10.0
libtpu: 0.0.40
codegen_flags: <defaults>
</compile_context>

<pallas_src>
import jax
import jax.numpy as jnp
from jax.experimental import pallas as pl
from jax.experimental.pallas import tpu as pltpu


_TARGET_BLOCK_BYTES = 4 * 1024 * 1024  # ~4 MiB per pipeline buffer


def _round_up(x: int, m: int) -> int:
    return ((x + m - 1) // m) * m


def _cdiv(a: int, b: int) -> int:
    return -(-a // b)


def _scale_kernel(scale_ref, x_ref, o_ref):
    # PyTorch builds gamma in x.dtype, so do the multiply in x.dtype.
    s = scale_ref[0].astype(o_ref.dtype)
    o_ref[...] = x_ref[...] * s


def _choose_lanes(total: int, sublane: int):
    """Largest multiple-of-128 lane width dividing `total` (prefer >= sublane rows)."""
    best = None
    for cand in (1024, 512, 256, 128):
        if total % cand == 0:
            if best is None:
                best = cand
            if total // cand >= sublane:
                return cand
    return best


def _choose_tile_rows(rows: int, lanes: int, itemsize: int, sublane: int) -> int:
    """Rows per tile so one pipeline buffer is ~_TARGET_BLOCK_BYTES, even tile count."""
    max_tile = (_TARGET_BLOCK_BYTES // (lanes * itemsize)) // sublane * sublane
    max_tile = max(sublane, max_tile)
    if rows <= max_tile:
        # Whole row axis fits one tile; try a sublane-aligned 2-way split so the
        # "parallel" grid axis can use both v7x TensorCores.
        if rows > 2 * sublane:
            half = _round_up(_cdiv(rows, 2), sublane)
            if half < rows:
                return half
        return rows  # single tile == full dim (allowed even if < sublane)
    tile = max_tile
    n = _cdiv(rows, tile)
    if n % 2 == 1:
        # Nudge to an even, balanced tile count (v7x dual-TC; neutral elsewhere).
        tile2 = _round_up(_cdiv(rows, n + 1), sublane)
        if sublane <= tile2 < rows:
            tile = tile2
    return tile


def mnv4_layer_scale(x: jax.Array, init_value, *, donate_input: bool = False) -> jax.Array:
    """Equivalent of MNV4layerScale.forward: x * (init_value * ones(x.shape[-1], x.dtype))."""
    orig_shape = x.shape
    total = x.size
    itemsize = jnp.dtype(x.dtype).itemsize
    sublane = max(8, 32 // itemsize)  # 8 f32, 16 bf16/f16, 32 int8/fp8

    # Runtime scalar in SMEM -> one compiled kernel shared by every layer-scale
    # instance regardless of init_value.
    scale = jnp.asarray([init_value], dtype=jnp.float32)

    flat = x.reshape(-1)
    lanes = _choose_lanes(total, sublane)
    padded = False
    if lanes is None:
        # TODO(synk): flattened size not a multiple of 128 -> pad only the tail;
        # this costs one extra copy in/out and is never hit by typical MNV4
        # activation shapes.
        lanes = 128
        new_total = _round_up(total, lanes)
        flat = jnp.pad(flat, (0, new_total - total))
        padded = True
        rows = new_total // lanes
    else:
        rows = total // lanes

    x2d = flat.reshape(rows, lanes)  # pure layout reshape: no extra HBM traffic
    tile_rows = _choose_tile_rows(rows, lanes, itemsize, sublane)
    grid = (_cdiv(rows, tile_rows),)  # ragged last tile: garbage reads ok, writes masked

    out2d = pl.pallas_call(
        _scale_kernel,
        out_shape=jax.ShapeDtypeStruct((rows, lanes), x.dtype),
        grid_spec=pltpu.PrefetchScalarGridSpec(
            num_scalar_prefetch=0,
            grid=grid,
            in_specs=[
                pl.BlockSpec(memory_space=pltpu.MemorySpace.SMEM),   # scale (1,) f32
                pl.BlockSpec((tile_rows, lanes), lambda i: (i, 0)),  # x tile
            ],
            out_specs=pl.BlockSpec((tile_rows, lanes), lambda i: (i, 0)),
        ),
        compiler_params=pltpu.CompilerParams(
            dimension_semantics=("parallel",),
            vmem_limit_bytes=32 << 20,
        ),
        # Only alias when the caller actually donates x (otherwise XLA would
        # insert a defensive copy).
        input_output_aliases=({1: 0} if donate_input else {}),
    )(scale, x2d)

    out_flat = out2d.reshape(-1)
    if padded:
        out_flat = out_flat[:total]
    return out_flat.reshape(orig_shape)


if __name__ == "__main__":
    key = jax.random.PRNGKey(0)
    # NCHW input, small shapes: batch=2, channels=4, spatial=16x16
    x = jax.random.normal(key, (2, 4, 16, 16), dtype=jnp.float32)
    init_value = 1e-5

    out = jax.block_until_ready(mnv4_layer_scale(x, init_value))

    # Reference: exactly what the PyTorch module computes.
    gamma = init_value * jnp.ones((x.shape[-1],), dtype=x.dtype)
    ref = x * gamma

    assert out.shape == x.shape and out.dtype == x.dtype
    assert jnp.array_equal(out, ref), "mismatch vs reference"

    print("KERNEL_OK")
</pallas_src>

<mosaic_0001>
module attributes {stable_mosaic.version = 11 : i64} {
  func.func @_scale_kernel(%arg0: i32, %arg1: memref<1xf32, #tpu.memory_space<smem>>, %arg2: memref<8x256xf32, #tpu.memory_space<vmem>>, %arg3: memref<8x256xf32, #tpu.memory_space<vmem>>) attributes {dimension_semantics = [#tpu.dimension_semantics<parallel>], iteration_bounds = array<i64: 1>, scalar_prefetch = 0 : i64, scratch_operands = 0 : i64, tpu.core_type = #tpu.core_type<tc>, window_params = [{transform_indices = @transform_0, window_bounds = array<i64: 1>}, {transform_indices = @transform_1, window_bounds = array<i64: 8, 256>}, {transform_indices = @transform_2, window_bounds = array<i64: 8, 256>}]} {
    %c0 = arith.constant 0 : index
    %0 = memref.load %arg1[%c0] : memref<1xf32, #tpu.memory_space<smem>>
    %c0_0 = arith.constant 0 : index
    %c0_1 = arith.constant 0 : index
    %1 = vector.load %arg2[%c0_0, %c0_1] : memref<8x256xf32, #tpu.memory_space<vmem>>, vector<8x256xf32>
    %2 = vector.broadcast %0 : f32 to vector<8x256xf32>
    %3 = arith.mulf %1, %2 : vector<8x256xf32>
    %c0_2 = arith.constant 0 : index
    %c0_3 = arith.constant 0 : index
    %4 = vector.load %arg3[%c0_2, %c0_3] : memref<8x256xf32, #tpu.memory_space<vmem>>, vector<8x256xf32>
    tpu.vector_store %arg3[%c0_2, %c0_3], %3 {strides = array<i32>} : memref<8x256xf32, #tpu.memory_space<vmem>>, vector<8x256xf32>,
    return
  }
  func.func @transform_0(%arg0: i32) -> i32 {
    %c0_i32 = arith.constant 0 : i32
    %c0_i32_0 = arith.constant 0 : i32
    return %c0_i32 : i32
  }
  func.func @transform_1(%arg0: i32) -> (i32, i32) {
    %c0_i32 = arith.constant 0 : i32
    %c0_i32_0 = arith.constant 0 : i32
    return %arg0, %c0_i32 : i32, i32
  }
  func.func @transform_2(%arg0: i32) -> (i32, i32) {
    %c0_i32 = arith.constant 0 : i32
    %c0_i32_0 = arith.constant 0 : i32
    return %arg0, %c0_i32 : i32, i32
  }
}

</mosaic_0001>

<llo_original>
// kernel: tpu_custom_call.1
$region0: #{tpu_custom_call.1}
  #allocation0 [shape = 'u32[]', space=smem, size = 0x4, offset = 0x4, fixed_abs, tag = 'smem constant byte address 0x4 - core index']
  #allocation1 [shape = 'u32[144,128]{1,0:T(1,128)}', space=vmem, size = 0x12000, scoped, tag = 'internal scratch']
  #allocation2 [shape = 'f32[1]{0:T(128)S(6)}', space=smem, size = 0x200, scoped, tag = 'scoped memory for tpu_custom_call.1']
  %s0 = inlined_call_operand.<no memory space> [shape: f32[1], index: 0, kind: input, shape index: {}]
  %s1 = inlined_call_operand.hbm [shape: f32[8,256], index: 1, kind: input, shape index: {}]
  %s2 = inlined_call_operand.hbm [shape: f32[8,256], index: 2, kind: output, shape index: {}]
  %s3 = sld [smem:[#allocation0]]
  $region22: #{tpu_custom_call.1} parent=0
    _
  %s5 = ssub.s32 1, %s3
  %s6 = scalar_select 0, %s5, %s3
  %7 = sst [smem:[#allocation2]] %s0
  $region1: #{tpu_custom_call.1} parent=0
    #allocation3 [shape = 'u8[8192]{0}', space=vmem, size = 0x2000, scoped, tag = 'input window, operand 1, single buffered']
    #allocation4 [shape = 's32[1]{0}', space=sflag, size = 0x4, scoped, tag = 'scoped memory for tpu_custom_call.1']
    #allocation5 [shape = 's32[1]{0}', space=sflag, size = 0x4, scoped, tag = 'scoped memory for tpu_custom_call.1']
    #allocation6 [shape = 'u8[8192]{0}', space=vmem, size = 0x2000, scoped, tag = 'output window, operand 0, single buffered']
    %8 = vsyncpa [#allocation4], 0
    %9 = vsyncpa [#allocation5], 0
    // Predicated region
    $region2: #{tpu_custom_call.1} parent=1 // pred_check
      _
    $region3: #{tpu_custom_call.1} parent=1 // pred_check_branch
      %11 = sbr.rel (0) target = $region5
    $region4: #{tpu_custom_call.1} parent=1 // pred_region
      _
    $region5: #{tpu_custom_call.1} parent=1 // pred_fallthru
      _
    // Predicated region
    $region6: #{tpu_custom_call.1} parent=1 // pred_check
      _
    $region7: #{tpu_custom_call.1} parent=1 // pred_check_branch
      %13 = sbr.rel (0) target = $region9
    $region8: #{tpu_custom_call.1} parent=1 // pred_region
      %s15 = ssub.s32 256, 256
      %16 = vsyncadd [#allocation4], %s15
      %s18 = sshll.u32 [#allocation3], 4
      %s19 = int_to_ptr.vmem [resolvable:$true] %s18
      %21 = dma.hbm_to_vmem [thread:$0]  %s1, 256, %s19, [#allocation4]
    $region9: #{tpu_custom_call.1} parent=1 // pred_fallthru
      _
    // Predicated region
    $region10: #{tpu_custom_call.1} parent=1 // pred_check
      _
    $region11: #{tpu_custom_call.1} parent=1 // pred_check_branch
      %23 = sbr.rel (0) target = $region13
    $region12: #{tpu_custom_call.1} parent=1 // pred_region
      %24 = dma.done [#allocation4], 256
    $region13: #{tpu_custom_call.1} parent=1 // pred_fallthru
      _
    %s25 = sld [smem:[#allocation2]]
    %v26 = vld [vmem:[#allocation3] sm:$0xff]
    %v27 = vld [vmem:[#allocation3 + $0x8] sm:$0xff]
    %v28 = vstv %s25
    %v29 = vmul.f32 %v26, %v28
    %v30 = vmul.f32 %v27, %v28
    %31 = vst [vmem:[#allocation6] sm:$0xff] %v29
    %32 = vst [vmem:[#allocation6 + $0x8] sm:$0xff] %v30
    // Predicated region
    $region14: #{tpu_custom_call.1} parent=1 // pred_check
      _
    $region15: #{tpu_custom_call.1} parent=1 // pred_check_branch
      %34 = sbr.rel (0) target = $region17
    $region16: #{tpu_custom_call.1} parent=1 // pred_region
      %s36 = ssub.s32 256, 256
      %37 = vsyncadd [#allocation5], %s36
      %s39 = sshll.u32 [#allocation6], 4
      %s40 = int_to_ptr.vmem [resolvable:$true] %s39
      %42 = dma.vmem_to_hbm [thread:$0]  %s40, 256, %s2, [#allocation5]
    $region17: #{tpu_custom_call.1} parent=1 // pred_fallthru
      _
    // Predicated region
    $region18: #{tpu_custom_call.1} parent=1 // pred_check
      _
    $region19: #{tpu_custom_call.1} parent=1 // pred_check_branch
      %44 = sbr.rel (0) target = $region21
    $region20: #{tpu_custom_call.1} parent=1 // pred_region
      %45 = dma.done [#allocation5], 256
    $region21: #{tpu_custom_call.1} parent=1 // pred_fallthru
      _
    %46 = vsyncpa [#allocation4], 1
    %47 = vsyncpa [#allocation5], 1

</llo_original>
